<compile_context>
chip_gen: v7x
topology: tpu7x:2x2x1
jax: 0.10.0
libtpu: 0.0.40
codegen_flags: <defaults>
</compile_context>

<pallas_src>
import functools

import jax
import jax.numpy as jnp
from jax import lax
from jax.experimental import pallas as pl
from jax.experimental.pallas import tpu as pltpu


def _round_up(x, m):
    return ((x + m - 1) // m) * m


def _cavitation_kernel(xin_ref, w1_ref, w2_ref, b2_ref, fc1w_ref, fc1b_ref,
                       fc2w_ref, fc2b_ref, out_ref, *, C1, C2, T1):
    half1 = T1 * C1

    # Conv1d(1 -> C1) + bias (folded via the ones input lane) as ONE MXU dot.
    # Even conv1 timesteps occupy lanes [:half1], odd timesteps [half1:].
    y = jnp.dot(xin_ref[...], w1_ref[...], preferred_element_type=jnp.float32)
    # Fused ReLU + MaxPool1d(2):  maxpool(relu(y)) == relu(max(even, odd)).
    h = jnp.maximum(jnp.maximum(y[:, :half1], y[:, half1:]), 0.0)

    # Conv1d(C1 -> C2) for both surviving timesteps as one packed dot: [z0|z1].
    z = jnp.dot(h.astype(jnp.bfloat16), w2_ref[...],
                preferred_element_type=jnp.float32) + b2_ref[...]
    z = jnp.maximum(z, 0.0)
    f = jnp.maximum(z[:, :C2], z[:, C2:])      # second MaxPool1d(2) -> (tm, C2)

    # Flatten (spatial == 1) + Linear(C2 -> 128) + ReLU.
    r = jnp.maximum(
        jnp.dot(f.astype(jnp.bfloat16), fc1w_ref[...],
                preferred_element_type=jnp.float32) + fc1b_ref[...], 0.0)

    # Linear(128 -> num_classes), zero-padded to a lane-dense 128-wide block.
    o = jnp.dot(r.astype(jnp.bfloat16), fc2w_ref[...],
                preferred_element_type=jnp.float32) + fc2b_ref[...]
    out_ref[...] = o.astype(out_ref.dtype)


def init_params(key, input_channels=1, num_filters=32, kernel_size=3,
                num_classes=7):
    """Deterministic PyTorch-layout parameters (uniform, kaiming-style bound)."""
    C1, C2 = num_filters, num_filters * 2
    ks = jax.random.split(key, 8)

    def u(k, shape, fan_in):
        bound = 1.0 / float(fan_in) ** 0.5
        return jax.random.uniform(k, shape, jnp.float32, -bound, bound)

    return {
        "w1": u(ks[0], (C1, input_channels, kernel_size), input_channels * kernel_size),
        "b1": u(ks[1], (C1,), input_channels * kernel_size),
        "w2": u(ks[2], (C2, C1, kernel_size), C1 * kernel_size),
        "b2": u(ks[3], (C2,), C1 * kernel_size),
        "fc1w": u(ks[4], (128, C2), C2),
        "fc1b": u(ks[5], (128,), C2),
        "fc2w": u(ks[6], (num_classes, 128), 128),
        "fc2b": u(ks[7], (num_classes,), 128),
    }


@functools.partial(jax.jit, static_argnames=("tm",))
def cavitation_forward(x, params, *, tm=2048):
    """x: (B, T) or (B, 1, T) -> logits (B, num_classes), float32."""
    if x.ndim == 3:
        assert x.shape[1] == 1
        x = x[:, 0, :]
    x = x.astype(jnp.float32)
    B, T = x.shape
    K = params["w1"].shape[-1]
    pad = K // 2
    C1 = params["w1"].shape[0]
    C2 = params["w2"].shape[0]
    num_classes = params["fc2w"].shape[0]
    T1 = T // 2
    assert T1 >= 2 and T1 // 2 == 1, \
        "classifier requires post-pool spatial size == 1 (T in {4..7})"
    assert num_classes <= 128

    N_OUT = 128                       # lane-dense padded class axis
    Txt = T + 2 * pad                 # zero-padded signal length
    Lin = _round_up(Txt + 1, 8)       # + ones lane for the conv1 bias fold

    # ---- batch tiling -------------------------------------------------------
    tm = max(8, min(tm, _round_up(B, 8)))
    # Give the pipeline / v7x megacore >= 4 batch steps once the batch is big
    # enough, without shrinking tiles below 512 rows (all multiples of 16 so
    # bf16 sublane tiling stays clean whenever grid > 1).
    if B >= 4 * 512:
        tm = min(tm, max(512, _round_up(pl.cdiv(B, 4), 16)))
    B_pad = _round_up(B, tm)

    # ---- input prep: pad, append the ones (bias) lane, cast to bf16 ----------
    xin = jnp.zeros((B_pad, Lin), jnp.float32)
    xin = xin.at[:B, pad:pad + T].set(x)
    xin = xin.at[:B, Txt].set(1.0)
    xin = xin.astype(jnp.bfloat16)

    # ---- weight prep: PyTorch layouts -> packed kernel layouts (bf16) --------
    # Conv1 block weight: one column group per conv1 timestep t (even -> first
    # half of lanes, odd -> second half); rows are padded-signal taps, row Txt
    # is the bias row hit by the ones input lane.
    w1 = jnp.transpose(params["w1"][:, 0, :], (1, 0)).astype(jnp.float32)   # (K, C1)
    w1blk = jnp.zeros((Lin, 2 * T1 * C1), jnp.float32)
    for t in range(2 * T1):
        col0 = (t % 2) * (T1 * C1) + (t // 2) * C1
        for k in range(K):
            w1blk = w1blk.at[t + k, col0:col0 + C1].set(w1[k])
        w1blk = w1blk.at[Txt, col0:col0 + C1].set(params["b1"])
    w1blk = w1blk.astype(jnp.bfloat16)                                      # (Lin, 2*T1*C1)

    # Conv2 block weight: rows grouped by pooled conv1 timestep (src), columns
    # by the two conv2 output timesteps that reach the second pool.
    W2 = jnp.transpose(params["w2"], (2, 1, 0)).astype(jnp.float32)         # (K, C1, C2)
    zero_blk = jnp.zeros((C1, C2), jnp.float32)
    rows = []
    for src in range(T1):
        cols = []
        for t in range(2):
            k = src - t + pad             # tap index: src == t + k - pad
            cols.append(W2[k] if 0 <= k < K else zero_blk)
        rows.append(jnp.concatenate(cols, axis=1))                          # (C1, 2*C2)
    w2blk = jnp.concatenate(rows, axis=0).astype(jnp.bfloat16)              # (T1*C1, 2*C2)
    b2pk = jnp.concatenate([params["b2"], params["b2"]])[None, :].astype(jnp.float32)

    fc1w = params["fc1w"].T.astype(jnp.bfloat16)                            # (C2, 128)
    fc1b = params["fc1b"][None, :].astype(jnp.float32)                      # (1, 128)
    fc2w = jnp.zeros((128, N_OUT), jnp.float32).at[:, :num_classes].set(
        params["fc2w"].T).astype(jnp.bfloat16)                              # (128, 128)
    fc2b = jnp.zeros((1, N_OUT), jnp.float32).at[:, :num_classes].set(
        params["fc2b"][None, :])                                            # (1, 128)

    grid = (B_pad // tm,)

    def resident(shape):
        # Full-array block, VMEM-resident across all grid steps.
        return pl.BlockSpec(shape, lambda i: (0, 0))

    flops = 2 * B_pad * (Lin * 2 * T1 * C1 + T1 * C1 * 2 * C2
                         + C2 * 128 + 128 * N_OUT)
    bytes_accessed = (B_pad * (Lin + N_OUT) * 2
                      + 2 * (w1blk.size + w2blk.size + fc1w.size + fc2w.size)
                      + 4 * (b2pk.size + fc1b.size + fc2b.size))

    kernel = functools.partial(_cavitation_kernel, C1=C1, C2=C2, T1=T1)
    out = pl.pallas_call(
        kernel,
        out_shape=jax.ShapeDtypeStruct((B_pad, N_OUT), jnp.bfloat16),
        grid=grid,
        in_specs=[
            pl.BlockSpec((tm, Lin), lambda i: (i, 0)),    # batch-tiled input
            resident((Lin, 2 * T1 * C1)),
            resident((T1 * C1, 2 * C2)),
            resident((1, 2 * C2)),
            resident((C2, 128)),
            resident((1, 128)),
            resident((128, N_OUT)),
            resident((1, N_OUT)),
        ],
        out_specs=pl.BlockSpec((tm, N_OUT), lambda i: (i, 0)),
        compiler_params=pltpu.CompilerParams(
            dimension_semantics=("parallel",)),
        cost_estimate=pl.CostEstimate(flops=int(flops), transcendentals=0,
                                      bytes_accessed=int(bytes_accessed)),
    )(xin, w1blk, w2blk, b2pk, fc1w, fc1b, fc2w, fc2b)

    return out[:B, :num_classes].astype(jnp.float32)


def reference_forward(x, p, *, match_kernel_precision=False):
    """Pure-JAX reference reproducing the PyTorch forward.

    With match_kernel_precision=True, inputs/weights/activations are rounded
    to bfloat16 at the same points as the Pallas kernel (f32 accumulation
    everywhere), isolating accumulation-order differences.
    """
    if x.ndim == 2:
        x = x[:, None, :]
    x = x.astype(jnp.float32)
    rd = ((lambda a: a.astype(jnp.bfloat16).astype(jnp.float32))
          if match_kernel_precision else (lambda a: a))
    prec = lax.Precision.HIGHEST

    def conv1d(h, w, b):
        pd = w.shape[-1] // 2
        y = lax.conv_general_dilated(h, w, (1,), [(pd, pd)],
                                     dimension_numbers=("NCH", "OIH", "NCH"),
                                     precision=prec)
        return y + b[None, :, None]

    def maxpool2(h):
        return lax.reduce_window(h, -jnp.inf, lax.max,
                                 (1, 1, 2), (1, 1, 2), "VALID")

    h = maxpool2(jax.nn.relu(conv1d(rd(x), rd(p["w1"]), rd(p["b1"]))))
    h = maxpool2(jax.nn.relu(conv1d(rd(h), rd(p["w2"]), p["b2"])))
    h = h.reshape(h.shape[0], -1)
    h = jax.nn.relu(jnp.dot(rd(h), rd(p["fc1w"]).T, precision=prec) + p["fc1b"])
    out = jnp.dot(rd(h), rd(p["fc2w"]).T, precision=prec) + p["fc2b"]
    if match_kernel_precision:
        out = out.astype(jnp.bfloat16)
    return out.astype(jnp.float32)


if __name__ == "__main__":
    key = jax.random.PRNGKey(0)
    pkey, xkey, xkey2 = jax.random.split(key, 3)
    params = init_params(pkey)

    # Small case matching the module spec (T=4 -> pool -> 2 -> pool -> 1).
    B, T = 2, 4
    x = jax.random.normal(xkey, (B, T), jnp.float32)
    logits = cavitation_forward(x, params)
    jax.block_until_ready(logits)
    assert logits.shape == (B, 7), logits.shape
    ref_match = reference_forward(x, params, match_kernel_precision=True)
    ref_f32 = reference_forward(x, params)
    assert jnp.allclose(logits, ref_match, atol=5e-3, rtol=5e-3), \
        float(jnp.max(jnp.abs(logits - ref_match)))
    assert jnp.allclose(logits, ref_f32, atol=1e-1, rtol=1e-1), \
        float(jnp.max(jnp.abs(logits - ref_f32)))

    # Larger batch exercising batch padding; also the (B, 1, T) input form.
    B2 = 200
    x2 = jax.random.normal(xkey2, (B2, 1, T), jnp.float32)
    logits2 = cavitation_forward(x2, params)
    jax.block_until_ready(logits2)
    assert logits2.shape == (B2, 7), logits2.shape
    ref2 = reference_forward(x2, params, match_kernel_precision=True)
    assert jnp.allclose(logits2, ref2, atol=5e-3, rtol=5e-3), \
        float(jnp.max(jnp.abs(logits2 - ref2)))

    print("KERNEL_OK")
</pallas_src>

<mosaic_0001>
module attributes {stable_mosaic.version = 11 : i64} {
  func.func @_cavitation_kernel(%arg0: i32, %arg1: memref<8x8xbf16, #tpu.memory_space<vmem>>, %arg2: memref<8x128xbf16, #tpu.memory_space<vmem>>, %arg3: memref<64x128xbf16, #tpu.memory_space<vmem>>, %arg4: memref<1x128xf32, #tpu.memory_space<vmem>>, %arg5: memref<64x128xbf16, #tpu.memory_space<vmem>>, %arg6: memref<1x128xf32, #tpu.memory_space<vmem>>, %arg7: memref<128x128xbf16, #tpu.memory_space<vmem>>, %arg8: memref<1x128xf32, #tpu.memory_space<vmem>>, %arg9: memref<8x128xbf16, #tpu.memory_space<vmem>>) attributes {dimension_semantics = [#tpu.dimension_semantics<parallel>], iteration_bounds = array<i64: 1>, scalar_prefetch = 0 : i64, scratch_operands = 0 : i64, tpu.core_type = #tpu.core_type<tc>, window_params = [{transform_indices = @transform_0, window_bounds = array<i64: 8, 8>}, {pipeline_mode = #tpu.pipeline_mode<synchronous>, transform_indices = @transform_1, window_bounds = array<i64: 8, 128>}, {pipeline_mode = #tpu.pipeline_mode<synchronous>, transform_indices = @transform_2, window_bounds = array<i64: 64, 128>}, {pipeline_mode = #tpu.pipeline_mode<synchronous>, transform_indices = @transform_3, window_bounds = array<i64: 1, 128>}, {pipeline_mode = #tpu.pipeline_mode<synchronous>, transform_indices = @transform_4, window_bounds = array<i64: 64, 128>}, {pipeline_mode = #tpu.pipeline_mode<synchronous>, transform_indices = @transform_5, window_bounds = array<i64: 1, 128>}, {pipeline_mode = #tpu.pipeline_mode<synchronous>, transform_indices = @transform_6, window_bounds = array<i64: 128, 128>}, {pipeline_mode = #tpu.pipeline_mode<synchronous>, transform_indices = @transform_7, window_bounds = array<i64: 1, 128>}, {transform_indices = @transform_8, window_bounds = array<i64: 8, 128>}]} {
    %c0 = arith.constant 0 : index
    %c0_0 = arith.constant 0 : index
    %0 = vector.load %arg1[%c0, %c0_0] : memref<8x8xbf16, #tpu.memory_space<vmem>>, vector<8x8xbf16>
    %c0_1 = arith.constant 0 : index
    %c0_2 = arith.constant 0 : index
    %1 = vector.load %arg2[%c0_1, %c0_2] : memref<8x128xbf16, #tpu.memory_space<vmem>>, vector<8x128xbf16>
    %cst = arith.constant dense<0.000000e+00> : vector<8x128xf32>
    %2 = tpu.matmul %0, %1, %cst {dimension_numbers = #tpu.dot_dimension_numbers<[1], [0], [0], [1], [0, 0, 1, 1], [], []>} : vector<8x8xbf16>, vector<8x128xbf16>, vector<8x128xf32> -> vector<8x128xf32>
    %3 = vector.extract_strided_slice %2 {offsets = [0, 0], sizes = [8, 64], strides = [1, 1]} : vector<8x128xf32> to vector<8x64xf32>
    %4 = vector.extract_strided_slice %2 {offsets = [0, 64], sizes = [8, 64], strides = [1, 1]} : vector<8x128xf32> to vector<8x64xf32>
    %5 = arith.maximumf %3, %4 : vector<8x64xf32>
    %cst_3 = arith.constant 0.000000e+00 : f32
    %6 = vector.broadcast %cst_3 : f32 to vector<8x64xf32>
    %7 = arith.maximumf %5, %6 : vector<8x64xf32>
    %8 = arith.truncf %7 : vector<8x64xf32> to vector<8x64xbf16>
    %c0_4 = arith.constant 0 : index
    %c0_5 = arith.constant 0 : index
    %9 = vector.load %arg3[%c0_4, %c0_5] : memref<64x128xbf16, #tpu.memory_space<vmem>>, vector<64x128xbf16>
    %cst_6 = arith.constant dense<0.000000e+00> : vector<8x128xf32>
    %10 = tpu.matmul %8, %9, %cst_6 {dimension_numbers = #tpu.dot_dimension_numbers<[1], [0], [0], [1], [0, 0, 1, 1], [], []>} : vector<8x64xbf16>, vector<64x128xbf16>, vector<8x128xf32> -> vector<8x128xf32>
    %c0_7 = arith.constant 0 : index
    %c0_8 = arith.constant 0 : index
    %11 = vector.load %arg4[%c0_7, %c0_8] : memref<1x128xf32, #tpu.memory_space<vmem>>, vector<1x128xf32>
    %12 = vector.broadcast %11 : vector<1x128xf32> to vector<8x128xf32>
    %13 = arith.addf %10, %12 : vector<8x128xf32>
    %cst_9 = arith.constant 0.000000e+00 : f32
    %14 = vector.broadcast %cst_9 : f32 to vector<8x128xf32>
    %15 = arith.maximumf %13, %14 : vector<8x128xf32>
    %16 = vector.extract_strided_slice %15 {offsets = [0, 0], sizes = [8, 64], strides = [1, 1]} : vector<8x128xf32> to vector<8x64xf32>
    %17 = vector.extract_strided_slice %15 {offsets = [0, 64], sizes = [8, 64], strides = [1, 1]} : vector<8x128xf32> to vector<8x64xf32>
    %18 = arith.maximumf %16, %17 : vector<8x64xf32>
    %19 = arith.truncf %18 : vector<8x64xf32> to vector<8x64xbf16>
    %c0_10 = arith.constant 0 : index
    %c0_11 = arith.constant 0 : index
    %20 = vector.load %arg5[%c0_10, %c0_11] : memref<64x128xbf16, #tpu.memory_space<vmem>>, vector<64x128xbf16>
    %cst_12 = arith.constant dense<0.000000e+00> : vector<8x128xf32>
    %21 = tpu.matmul %19, %20, %cst_12 {dimension_numbers = #tpu.dot_dimension_numbers<[1], [0], [0], [1], [0, 0, 1, 1], [], []>} : vector<8x64xbf16>, vector<64x128xbf16>, vector<8x128xf32> -> vector<8x128xf32>
    %c0_13 = arith.constant 0 : index
    %c0_14 = arith.constant 0 : index
    %22 = vector.load %arg6[%c0_13, %c0_14] : memref<1x128xf32, #tpu.memory_space<vmem>>, vector<1x128xf32>
    %23 = vector.broadcast %22 : vector<1x128xf32> to vector<8x128xf32>
    %24 = arith.addf %21, %23 : vector<8x128xf32>
    %cst_15 = arith.constant 0.000000e+00 : f32
    %25 = vector.broadcast %cst_15 : f32 to vector<8x128xf32>
    %26 = arith.maximumf %24, %25 : vector<8x128xf32>
    %27 = arith.truncf %26 : vector<8x128xf32> to vector<8x128xbf16>
    %c0_16 = arith.constant 0 : index
    %c0_17 = arith.constant 0 : index
    %28 = vector.load %arg7[%c0_16, %c0_17] : memref<128x128xbf16, #tpu.memory_space<vmem>>, vector<128x128xbf16>
    %cst_18 = arith.constant dense<0.000000e+00> : vector<8x128xf32>
    %29 = tpu.matmul %27, %28, %cst_18 {dimension_numbers = #tpu.dot_dimension_numbers<[1], [0], [0], [1], [0, 0, 1, 1], [], []>} : vector<8x128xbf16>, vector<128x128xbf16>, vector<8x128xf32> -> vector<8x128xf32>
    %c0_19 = arith.constant 0 : index
    %c0_20 = arith.constant 0 : index
    %30 = vector.load %arg8[%c0_19, %c0_20] : memref<1x128xf32, #tpu.memory_space<vmem>>, vector<1x128xf32>
    %31 = vector.broadcast %30 : vector<1x128xf32> to vector<8x128xf32>
    %32 = arith.addf %29, %31 : vector<8x128xf32>
    %33 = arith.truncf %32 : vector<8x128xf32> to vector<8x128xbf16>
    %c0_21 = arith.constant 0 : index
    %c0_22 = arith.constant 0 : index
    %34 = vector.load %arg9[%c0_21, %c0_22] : memref<8x128xbf16, #tpu.memory_space<vmem>>, vector<8x128xbf16>
    tpu.vector_store %arg9[%c0_21, %c0_22], %33 {strides = array<i32>} : memref<8x128xbf16, #tpu.memory_space<vmem>>, vector<8x128xbf16>,
    return
  }
  func.func @transform_0(%arg0: i32) -> (i32, i32) {
    %c0_i32 = arith.constant 0 : i32
    %c0_i32_0 = arith.constant 0 : i32
    return %arg0, %c0_i32 : i32, i32
  }
  func.func @transform_1(%arg0: i32) -> (i32, i32) {
    %c0_i32 = arith.constant 0 : i32
    %c0_i32_0 = arith.constant 0 : i32
    %c0_i32_1 = arith.constant 0 : i32
    return %c0_i32, %c0_i32_0 : i32, i32
  }
  func.func @transform_2(%arg0: i32) -> (i32, i32) {
    %c0_i32 = arith.constant 0 : i32
    %c0_i32_0 = arith.constant 0 : i32
    %c0_i32_1 = arith.constant 0 : i32
    return %c0_i32, %c0_i32_0 : i32, i32
  }
  func.func @transform_3(%arg0: i32) -> (i32, i32) {
    %c0_i32 = arith.constant 0 : i32
    %c0_i32_0 = arith.constant 0 : i32
    %c0_i32_1 = arith.constant 0 : i32
    return %c0_i32, %c0_i32_0 : i32, i32
  }
  func.func @transform_4(%arg0: i32) -> (i32, i32) {
    %c0_i32 = arith.constant 0 : i32
    %c0_i32_0 = arith.constant 0 : i32
    %c0_i32_1 = arith.constant 0 : i32
    return %c0_i32, %c0_i32_0 : i32, i32
  }
  func.func @transform_5(%arg0: i32) -> (i32, i32) {
    %c0_i32 = arith.constant 0 : i32
    %c0_i32_0 = arith.constant 0 : i32
    %c0_i32_1 = arith.constant 0 : i32
    return %c0_i32, %c0_i32_0 : i32, i32
  }
  func.func @transform_6(%arg0: i32) -> (i32, i32) {
    %c0_i32 = arith.constant 0 : i32
    %c0_i32_0 = arith.constant 0 : i32
    %c0_i32_1 = arith.constant 0 : i32
    return %c0_i32, %c0_i32_0 : i32, i32
  }
  func.func @transform_7(%arg0: i32) -> (i32, i32) {
    %c0_i32 = arith.constant 0 : i32
    %c0_i32_0 = arith.constant 0 : i32
    %c0_i32_1 = arith.constant 0 : i32
    return %c0_i32, %c0_i32_0 : i32, i32
  }
  func.func @transform_8(%arg0: i32) -> (i32, i32) {
    %c0_i32 = arith.constant 0 : i32
    %c0_i32_0 = arith.constant 0 : i32
    return %arg0, %c0_i32 : i32, i32
  }
}

</mosaic_0001>

<llo_original>
// kernel: cavitation_forward.1
$region0: #{cavitation_forward.1}
  #allocation0 [shape = 'u32[]', space=smem, size = 0x4, offset = 0x4, fixed_abs, tag = 'smem constant byte address 0x4 - core index']
  #allocation1 [shape = 'u32[144,128]{1,0:T(1,128)}', space=vmem, size = 0x12000, scoped, tag = 'internal scratch']
  %s0 = inlined_call_operand.vmem [shape: bf16[8,8], index: 0, kind: input, shape index: {}]
  %s1 = inlined_call_operand.vmem [shape: bf16[8,128], index: 1, kind: input, shape index: {}]
  %s2 = inlined_call_operand.vmem [shape: bf16[64,128], index: 2, kind: input, shape index: {}]
  %s3 = inlined_call_operand.vmem [shape: f32[1,128], index: 3, kind: input, shape index: {}]
  %s4 = inlined_call_operand.vmem [shape: bf16[64,128], index: 4, kind: input, shape index: {}]
  %s5 = inlined_call_operand.vmem [shape: f32[1,128], index: 5, kind: input, shape index: {}]
  %s6 = inlined_call_operand.vmem [shape: bf16[128,128], index: 6, kind: input, shape index: {}]
  %s7 = inlined_call_operand.vmem [shape: f32[1,128], index: 7, kind: input, shape index: {}]
  %s8 = inlined_call_operand.vmem [shape: bf16[8,128], index: 8, kind: output, shape index: {}]
  %s9 = sld [smem:[#allocation0]]
  $region42: #{cavitation_forward.1} parent=0
    _
  %s11 = ssub.s32 1, %s9
  %s12 = scalar_select 0, %s11, %s9
  // Predicated region
  $region2: #{cavitation_forward.1} parent=0 // pred_check
    _
  $region3: #{cavitation_forward.1} parent=0 // pred_check_branch
    %14 = sbr.rel (0) target = $region5
  $region4: #{cavitation_forward.1} parent=0 // pred_region
    _
  $region5: #{cavitation_forward.1} parent=0 // pred_fallthru
    _
  // Predicated region
  $region6: #{cavitation_forward.1} parent=0 // pred_check
    _
  $region7: #{cavitation_forward.1} parent=0 // pred_check_branch
    %16 = sbr.rel (0) target = $region9
  $region8: #{cavitation_forward.1} parent=0 // pred_region
    _
  $region9: #{cavitation_forward.1} parent=0 // pred_fallthru
    _
  // Predicated region
  $region10: #{cavitation_forward.1} parent=0 // pred_check
    _
  $region11: #{cavitation_forward.1} parent=0 // pred_check_branch
    %18 = sbr.rel (0) target = $region13
  $region12: #{cavitation_forward.1} parent=0 // pred_region
    _
  $region13: #{cavitation_forward.1} parent=0 // pred_fallthru
    _
  // Predicated region
  $region14: #{cavitation_forward.1} parent=0 // pred_check
    _
  $region15: #{cavitation_forward.1} parent=0 // pred_check_branch
    %20 = sbr.rel (0) target = $region17
  $region16: #{cavitation_forward.1} parent=0 // pred_region
    _
  $region17: #{cavitation_forward.1} parent=0 // pred_fallthru
    _
  // Predicated region
  $region18: #{cavitation_forward.1} parent=0 // pred_check
    _
  $region19: #{cavitation_forward.1} parent=0 // pred_check_branch
    %22 = sbr.rel (0) target = $region21
  $region20: #{cavitation_forward.1} parent=0 // pred_region
    _
  $region21: #{cavitation_forward.1} parent=0 // pred_fallthru
    _
  // Predicated region
  $region22: #{cavitation_forward.1} parent=0 // pred_check
    _
  $region23: #{cavitation_forward.1} parent=0 // pred_check_branch
    %24 = sbr.rel (0) target = $region25
  $region24: #{cavitation_forward.1} parent=0 // pred_region
    _
  $region25: #{cavitation_forward.1} parent=0 // pred_fallthru
    _
  // Predicated region
  $region26: #{cavitation_forward.1} parent=0 // pred_check
    _
  $region27: #{cavitation_forward.1} parent=0 // pred_check_branch
    %26 = sbr.rel (0) target = $region29
  $region28: #{cavitation_forward.1} parent=0 // pred_region
    _
  $region29: #{cavitation_forward.1} parent=0 // pred_fallthru
    _
  // Predicated region
  $region30: #{cavitation_forward.1} parent=0 // pred_check
    _
  $region31: #{cavitation_forward.1} parent=0 // pred_check_branch
    %28 = sbr.rel (0) target = $region33
  $region32: #{cavitation_forward.1} parent=0 // pred_region
    _
  $region33: #{cavitation_forward.1} parent=0 // pred_fallthru
    _
  %v30 = vld [vmem:[%s0] sm:$0xf]
  %v31 = vld [vmem:[%s1] sm:$0xf]
  %vm32 = vcmask 64512
  %v34 = vsel %vm32, %v30, 0
  %vm36 = vcmask 1043456
  %v38 = vsel %vm36, %v31, 0
  %40 = vmatprep.subr.bf16.mxu0 0
  %41 = vmatpush1.bf16.msra.mxu0 %v38
  %42 = vmatprep.subr.bf16.mxu0 0
  %43 = vmatpush1.bf16.msra.mxu0 0
  %44 = vmatprep.subr.bf16.mxu0 0
  %45 = vmatpush1.bf16.msra.mxu0 0
  %46 = vmatprep.subr.bf16.mxu0 0
  %47 = vmatpush1.bf16.msra.mxu0 0
  %48 = vmatprep.subr.bf16.mxu0 0
  %49 = vmatpush1.bf16.msra.mxu0 0
  %50 = vmatprep.subr.bf16.mxu0 0
  %51 = vmatpush1.bf16.msra.mxu0 0
  %52 = vmatprep.subr.bf16.mxu0 0
  %53 = vmatpush1.bf16.msra.mxu0 0
  %54 = vmatprep.subr.bf16.mxu0 0
  %55 = vmatpush1.bf16.msra.mxu0 0
  %56 = vmatprep.subr.bf16.mxu0 0
  %57 = vmatpush1.bf16.msra.mxu0 0
  %58 = vmatprep.subr.bf16.mxu0 0
  %59 = vmatpush1.bf16.msra.mxu0 0
  %60 = vmatprep.subr.bf16.mxu0 0
  %61 = vmatpush1.bf16.msra.mxu0 0
  %62 = vmatprep.subr.bf16.mxu0 0
  %63 = vmatpush1.bf16.msra.mxu0 0
  %64 = vmatprep.subr.bf16.mxu0 0
  %65 = vmatpush1.bf16.msra.mxu0 0
  %66 = vmatprep.subr.bf16.mxu0 0
  %67 = vmatpush1.bf16.msra.mxu0 0
  %68 = vmatprep.subr.bf16.mxu0 0
  %69 = vmatpush1.bf16.msra.mxu0 0
  %70 = vmatprep.subr.bf16.mxu0 0
  %71 = vmatpush1.bf16.msra.mxu0 0
  %72 = vmatprep.mubr.bf16.mxu0 0
  %73 = vmatmul.mubr.bf16.gmra.mrb[0].mxu0 %v34
  %v74 = vpop.f32.mrb[0].mxu0
  %v75 = vadd.f32 0.0, %v74
  %v76 = vpop.f32.mrb[0].mxu0
  %v77 = vpop.f32.mrb[0].mxu0
  %v78 = vpop.f32.mrb[0].mxu0
  %79 = vdwg.mxu0
  %81 = vrot.lane.b32.xlu0 %v75, 64
  %v82 = vpop.permute.xlu0 %81
  %v84 = vmax.f32 %v75, %v82
  %v85 = vmax.f32 %v84, 0.0
  %v86 = vpack.c.bf16 %v85, %v85
  %v87 = vld [vmem:[%s2] sm:$0xf]
  %v88 = vld [vmem:[%s2 + $0x4] sm:$0xf]
  %v89 = vld [vmem:[%s2 + $0x8] sm:$0xf]
  %v90 = vld [vmem:[%s2 + $0xc] sm:$0xf]
  %v91 = vld [vmem:[%s2 + $0x10] sm:$0xf]
  %v92 = vld [vmem:[%s2 + $0x14] sm:$0xf]
  %v93 = vld [vmem:[%s2 + $0x18] sm:$0xf]
  %v94 = vld [vmem:[%s2 + $0x1c] sm:$0xf]
  %v95 = vld [vmem:[%s3] sm:$0x1]
  %v97 = vlaneseq
  %v98 = vshrl.u32 %v97, 7
  %v99 = vsub.s32 0, %v98
  %v100 = vrot.slane %v95, %v99
  %v110 = vunpack.c.l.b16 %v87
  %v111 = vunpack.c.l.b16 %v88
  %v112 = vunpack.c.l.b16 %v89
  %v113 = vunpack.c.l.b16 %v90
  %v114 = vunpack.c.l.b16 %v91
  %v115 = vunpack.c.l.b16 %v92
  %v116 = vunpack.c.l.b16 %v93
  %v117 = vunpack.c.l.b16 %v94
  %v118 = vpack.c.b16 %v111, %v110
  %v119 = vpack.c.b16 %v113, %v112
  %v120 = vpack.c.b16 %v115, %v114
  %v121 = vpack.c.b16 %v117, %v116
  %vm126 = vcmask 523264
  %v128 = vsel %vm126, %v86, 0
  %130 = vmatprep.subr.bf16.mxu0 0
  %131 = vmatpush1.bf16.msra.mxu0 %v118
  %132 = vmatprep.subr.bf16.mxu0 0
  %133 = vmatpush1.bf16.msra.mxu0 %v119
  %134 = vmatprep.subr.bf16.mxu0 0
  %135 = vmatpush1.bf16.msra.mxu0 %v120
  %136 = vmatprep.subr.bf16.mxu0 0
  %137 = vmatpush1.bf16.msra.mxu0 %v121
  %138 = vmatprep.subr.bf16.mxu0 0
  %139 = vmatpush1.bf16.msra.mxu0 0
  %140 = vmatprep.subr.bf16.mxu0 0
  %141 = vmatpush1.bf16.msra.mxu0 0
  %142 = vmatprep.subr.bf16.mxu0 0
  %143 = vmatpush1.bf16.msra.mxu0 0
  %144 = vmatprep.subr.bf16.mxu0 0
  %145 = vmatpush1.bf16.msra.mxu0 0
  %146 = vmatprep.subr.bf16.mxu0 0
  %147 = vmatpush1.bf16.msra.mxu0 0
  %148 = vmatprep.subr.bf16.mxu0 0
  %149 = vmatpush1.bf16.msra.mxu0 0
  %150 = vmatprep.subr.bf16.mxu0 0
  %151 = vmatpush1.bf16.msra.mxu0 0
  %152 = vmatprep.subr.bf16.mxu0 0
  %153 = vmatpush1.bf16.msra.mxu0 0
  %154 = vmatprep.subr.bf16.mxu0 0
  %155 = vmatpush1.bf16.msra.mxu0 0
  %156 = vmatprep.subr.bf16.mxu0 0
  %157 = vmatpush1.bf16.msra.mxu0 0
  %158 = vmatprep.subr.bf16.mxu0 0
  %159 = vmatpush1.bf16.msra.mxu0 0
  %160 = vmatprep.subr.bf16.mxu0 0
  %161 = vmatpush1.bf16.msra.mxu0 0
  %162 = vmatprep.mubr.bf16.mxu0 0
  %163 = vmatmul.mubr.bf16.gmra.mrb[0].mxu0 %v128
  %v164 = vpop.f32.mrb[0].mxu0
  %v165 = vadd.f32 %v100, %v164
  %v166 = vpop.f32.mrb[0].mxu0
  %v167 = vpop.f32.mrb[0].mxu0
  %v168 = vpop.f32.mrb[0].mxu0
  %169 = vdwg.mxu0
  %v170 = vmax.f32 %v165, 0.0
  %172 = vrot.lane.b32.xlu0 %v170, 64
  %v173 = vpop.permute.xlu0 %172
  %v175 = vmax.f32 %v170, %v173
  %v176 = vpack.c.bf16 %v175, %v175
  %v177 = vld [vmem:[%s4] sm:$0xf]
  %v178 = vld [vmem:[%s4 + $0x4] sm:$0xf]
  %v179 = vld [vmem:[%s4 + $0x8] sm:$0xf]
  %v180 = vld [vmem:[%s4 + $0xc] sm:$0xf]
  %v181 = vld [vmem:[%s4 + $0x10] sm:$0xf]
  %v182 = vld [vmem:[%s4 + $0x14] sm:$0xf]
  %v183 = vld [vmem:[%s4 + $0x18] sm:$0xf]
  %v184 = vld [vmem:[%s4 + $0x1c] sm:$0xf]
  %v185 = vld [vmem:[%s5] sm:$0x1]
  %v187 = vlaneseq
  %v188 = vshrl.u32 %v187, 7
  %v189 = vsub.s32 0, %v188
  %v190 = vrot.slane %v185, %v189
  %v200 = vunpack.c.l.b16 %v177
  %v201 = vunpack.c.l.b16 %v178
  %v202 = vunpack.c.l.b16 %v179
  %v203 = vunpack.c.l.b16 %v180
  %v204 = vunpack.c.l.b16 %v181
  %v205 = vunpack.c.l.b16 %v182
  %v206 = vunpack.c.l.b16 %v183
  %v207 = vunpack.c.l.b16 %v184
  %v208 = vpack.c.b16 %v201, %v200
  %v209 = vpack.c.b16 %v203, %v202
  %v210 = vpack.c.b16 %v205, %v204
  %v211 = vpack.c.b16 %v207, %v206
  %v217 = vsel %vm126, %v176, 0
  %219 = vmatprep.subr.bf16.mxu0 0
  %220 = vmatpush1.bf16.msra.mxu0 %v208
  %221 = vmatprep.subr.bf16.mxu0 0
  %222 = vmatpush1.bf16.msra.mxu0 %v209
  %223 = vmatprep.subr.bf16.mxu0 0
  %224 = vmatpush1.bf16.msra.mxu0 %v210
  %225 = vmatprep.subr.bf16.mxu0 0
  %226 = vmatpush1.bf16.msra.mxu0 %v211
  %227 = vmatprep.subr.bf16.mxu0 0
  %228 = vmatpush1.bf16.msra.mxu0 0
  %229 = vmatprep.subr.bf16.mxu0 0
  %230 = vmatpush1.bf16.msra.mxu0 0
  %231 = vmatprep.subr.bf16.mxu0 0
  %232 = vmatpush1.bf16.msra.mxu0 0
  %233 = vmatprep.subr.bf16.mxu0 0
  %234 = vmatpush1.bf16.msra.mxu0 0
  %235 = vmatprep.subr.bf16.mxu0 0
  %236 = vmatpush1.bf16.msra.mxu0 0
  %237 = vmatprep.subr.bf16.mxu0 0
  %238 = vmatpush1.bf16.msra.mxu0 0
  %239 = vmatprep.subr.bf16.mxu0 0
  %240 = vmatpush1.bf16.msra.mxu0 0
  %241 = vmatprep.subr.bf16.mxu0 0
  %242 = vmatpush1.bf16.msra.mxu0 0
  %243 = vmatprep.subr.bf16.mxu0 0
  %244 = vmatpush1.bf16.msra.mxu0 0
  %245 = vmatprep.subr.bf16.mxu0 0
  %246 = vmatpush1.bf16.msra.mxu0 0
  %247 = vmatprep.subr.bf16.mxu0 0
  %248 = vmatpush1.bf16.msra.mxu0 0
  %249 = vmatprep.subr.bf16.mxu0 0
  %250 = vmatpush1.bf16.msra.mxu0 0
  %251 = vmatprep.mubr.bf16.mxu0 0
  %252 = vmatmul.mubr.bf16.gmra.mrb[0].mxu0 %v217
  %v253 = vpop.f32.mrb[0].mxu0
  %v254 = vadd.f32 %v190, %v253
  %v255 = vpop.f32.mrb[0].mxu0
  %v256 = vpop.f32.mrb[0].mxu0
  %v257 = vpop.f32.mrb[0].mxu0
  %258 = vdwg.mxu0
  %v259 = vmax.f32 %v254, 0.0
  %v260 = vpack.c.bf16 %v259, %v259
  %v261 = vld [vmem:[%s6] sm:$0xf]
  %v262 = vld [vmem:[%s6 + $0x4] sm:$0xf]
  %v263 = vld [vmem:[%s6 + $0x8] sm:$0xf]
  %v264 = vld [vmem:[%s6 + $0xc] sm:$0xf]
  %v265 = vld [vmem:[%s6 + $0x10] sm:$0xf]
  %v266 = vld [vmem:[%s6 + $0x14] sm:$0xf]
  %v267 = vld [vmem:[%s6 + $0x18] sm:$0xf]
  %v268 = vld [vmem:[%s6 + $0x1c] sm:$0xf]
  %v269 = vld [vmem:[%s6 + $0x20] sm:$0xf]
  %v270 = vld [vmem:[%s6 + $0x24] sm:$0xf]
  %v271 = vld [vmem:[%s6 + $0x28] sm:$0xf]
  %v272 = vld [vmem:[%s6 + $0x2c] sm:$0xf]
  %v273 = vld [vmem:[%s6 + $0x30] sm:$0xf]
  %v274 = vld [vmem:[%s6 + $0x34] sm:$0xf]
  %v275 = vld [vmem:[%s6 + $0x38] sm:$0xf]
  %v276 = vld [vmem:[%s6 + $0x3c] sm:$0xf]
  %v277 = vld [vmem:[%s7] sm:$0x1]
  %v279 = vlaneseq
  %v280 = vshrl.u32 %v279, 7
  %v281 = vsub.s32 0, %v280
  %v282 = vrot.slane %v277, %v281
  %v300 = vunpack.c.l.b16 %v261
  %v301 = vunpack.c.l.b16 %v262
  %v302 = vunpack.c.l.b16 %v263
  %v303 = vunpack.c.l.b16 %v264
  %v304 = vunpack.c.l.b16 %v265
  %v305 = vunpack.c.l.b16 %v266
  %v306 = vunpack.c.l.b16 %v267
  %v307 = vunpack.c.l.b16 %v268
  %v308 = vunpack.c.l.b16 %v269
  %v309 = vunpack.c.l.b16 %v270
  %v310 = vunpack.c.l.b16 %v271
  %v311 = vunpack.c.l.b16 %v272
  %v312 = vunpack.c.l.b16 %v273
  %v313 = vunpack.c.l.b16 %v274
  %v314 = vunpack.c.l.b16 %v275
  %v315 = vunpack.c.l.b16 %v276
  %v316 = vpack.c.b16 %v301, %v300
  %v317 = vpack.c.b16 %v303, %v302
  %v318 = vpack.c.b16 %v305, %v304
  %v319 = vpack.c.b16 %v307, %v306
  %v320 = vpack.c.b16 %v309, %v308
  %v321 = vpack.c.b16 %v311, %v310
  %v322 = vpack.c.b16 %v313, %v312
  %v323 = vpack.c.b16 %v315, %v314
  %332 = vmatprep.subr.bf16.mxu0 0
  %333 = vmatpush1.bf16.msra.mxu0 %v316
  %334 = vmatprep.subr.bf16.mxu0 0
  %335 = vmatpush1.bf16.msra.mxu0 %v317
  %336 = vmatprep.subr.bf16.mxu0 0
  %337 = vmatpush1.bf16.msra.mxu0 %v318
  %338 = vmatprep.subr.bf16.mxu0 0
  %339 = vmatpush1.bf16.msra.mxu0 %v319
  %340 = vmatprep.subr.bf16.mxu0 0
  %341 = vmatpush1.bf16.msra.mxu0 %v320
  %342 = vmatprep.subr.bf16.mxu0 0
  %343 = vmatpush1.bf16.msra.mxu0 %v321
  %344 = vmatprep.subr.bf16.mxu0 0
  %345 = vmatpush1.bf16.msra.mxu0 %v322
  %346 = vmatprep.subr.bf16.mxu0 0
  %347 = vmatpush1.bf16.msra.mxu0 %v323
  %348 = vmatprep.subr.bf16.mxu0 0
  %349 = vmatpush1.bf16.msra.mxu0 0
  %350 = vmatprep.subr.bf16.mxu0 0
  %351 = vmatpush1.bf16.msra.mxu0 0
  %352 = vmatprep.subr.bf16.mxu0 0
  %353 = vmatpush1.bf16.msra.mxu0 0
  %354 = vmatprep.subr.bf16.mxu0 0
  %355 = vmatpush1.bf16.msra.mxu0 0
  %356 = vmatprep.subr.bf16.mxu0 0
  %357 = vmatpush1.bf16.msra.mxu0 0
  %358 = vmatprep.subr.bf16.mxu0 0
  %359 = vmatpush1.bf16.msra.mxu0 0
  %360 = vmatprep.subr.bf16.mxu0 0
  %361 = vmatpush1.bf16.msra.mxu0 0
  %362 = vmatprep.subr.bf16.mxu0 0
  %363 = vmatpush1.bf16.msra.mxu0 0
  %364 = vmatprep.mubr.bf16.mxu0 0
  %365 = vmatmul.mubr.bf16.gmra.mrb[0].mxu0 %v260
  %v366 = vpop.f32.mrb[0].mxu0
  %v367 = vadd.f32 %v282, %v366
  %v368 = vpop.f32.mrb[0].mxu0
  %v369 = vpop.f32.mrb[0].mxu0
  %v370 = vpop.f32.mrb[0].mxu0
  %371 = vdwg.mxu0
  %v372 = vpack.c.bf16 %v367, %v367
  %373 = vst [vmem:[%s8] sm:$0xf] %v372
  // Predicated region
  $region34: #{cavitation_forward.1} parent=0 // pred_check
    _
  $region35: #{cavitation_forward.1} parent=0 // pred_check_branch
    %375 = sbr.rel (0) target = $region37
  $region36: #{cavitation_forward.1} parent=0 // pred_region
    _
  $region37: #{cavitation_forward.1} parent=0 // pred_fallthru
    _
  // Predicated region
  $region38: #{cavitation_forward.1} parent=0 // pred_check
    _
  $region39: #{cavitation_forward.1} parent=0 // pred_check_branch
    %377 = sbr.rel (0) target = $region41
  $region40: #{cavitation_forward.1} parent=0 // pred_region
    _
  $region41: #{cavitation_forward.1} parent=0 // pred_fallthru
    _

</llo_original>
